<compile_context>
chip_gen: v7x
topology: tpu7x:2x2x1
jax: 0.10.0
libtpu: 0.0.40
codegen_flags: <defaults>
</compile_context>

<pallas_src>
import functools

import jax
import jax.numpy as jnp
from jax.experimental import pallas as pl
from jax.experimental.pallas import tpu as pltpu

EPS = 1e-15  # matches the PyTorch module; in fp32 the upper clamp is a no-op, same as torch


def _pick_tile_rows(n_rows, n_cols, target_bytes=1 << 20):
    """Row tile giving ~target_bytes of f32 per input tile; multiple of 8; sane for small N."""
    tr = (target_bytes // (4 * n_cols)) // 8 * 8
    tr = max(8, int(tr))
    if n_rows >= 8:
        tr = min(tr, (n_rows // 8) * 8)
    return max(8, tr)


def _wll_kernel(p_ref, t_ref, o_ref, *, n_rows, tile_rows, n_cols, need_mask):
    """One (tile_rows, C) block -> (8, C) unweighted partial column sums."""
    p = p_ref[...].astype(jnp.float32)
    t = t_ref[...].astype(jnp.float32)
    p = jnp.clip(p, EPS, 1.0 - EPS)                 # clamp like torch.clamp
    log_p = jnp.log(p)
    log_1mp = jnp.log(1.0 - p)
    # -(t*log(p) + (1-t)*log(1-p)) rewritten to drop one VPU multiply per element.
    ll = -(t * (log_p - log_1mp) + log_1mp)
    if need_mask:
        # Zero out padded rows of the final partial block.
        row0 = pl.program_id(0) * tile_rows
        rows = row0 + jax.lax.broadcasted_iota(jnp.int32, (tile_rows, 1), 0)
        ll = jnp.where(rows < n_rows, ll, 0.0)
    # Reduce (tile_rows, C) -> (8, C) with plain VPU adds over the major axis
    # (tiling-compatible reshape; no per-element XLU reduce, no SMEM scalar RMW).
    o_ref[...] = jnp.sum(ll.reshape(tile_rows // 8, 8, n_cols), axis=0)


def weighted_log_loss(preds, targets, weights=None):
    """preds, targets: (N, C) float32/bfloat16; weights: (C,) or None. Scalar mean loss."""
    N, C = preds.shape
    tile_rows = _pick_tile_rows(N, C)
    num_blocks = (N + tile_rows - 1) // tile_rows
    need_mask = (N % tile_rows) != 0

    kernel = functools.partial(
        _wll_kernel, n_rows=N, tile_rows=tile_rows, n_cols=C, need_mask=need_mask)

    partials = pl.pallas_call(
        kernel,
        out_shape=jax.ShapeDtypeStruct((num_blocks * 8, C), jnp.float32),
        grid_spec=pltpu.PrefetchScalarGridSpec(
            num_scalar_prefetch=0,
            grid=(num_blocks,),
            in_specs=[
                pl.BlockSpec((tile_rows, C), lambda i: (i, 0)),   # preds tile
                pl.BlockSpec((tile_rows, C), lambda i: (i, 0)),   # targets tile
            ],
            out_specs=pl.BlockSpec((8, C), lambda i: (i, 0)),     # per-block partial sums
        ),
        compiler_params=pltpu.CompilerParams(
            dimension_semantics=("parallel",),        # independent blocks (v7x: both TCs)
            vmem_limit_bytes=32 * 1024 * 1024,
        ),
    )(preds, targets)

    col_sums = jnp.sum(partials, axis=0)                          # (C,)
    if weights is not None:
        total = jnp.dot(col_sums, weights.astype(jnp.float32))    # sum(ll*w) == dot(colsum, w)
    else:
        total = jnp.sum(col_sums)
    return total / jnp.float32(N * C)


def weighted_log_loss_ref(preds, targets, weights=None):
    p = jnp.clip(preds.astype(jnp.float32), EPS, 1.0 - EPS)
    t = targets.astype(jnp.float32)
    ll = -(t * jnp.log(p) + (1.0 - t) * jnp.log(1.0 - p))
    if weights is not None:
        ll = ll * weights.reshape(1, -1).astype(jnp.float32)
    return jnp.mean(ll)


if __name__ == "__main__":
    key = jax.random.PRNGKey(0)
    k1, k2, k3, k4 = jax.random.split(key, 4)

    # Case 1: small, tile-aligned (batch=16 samples, 5 classes) with per-class weights.
    N1, C1 = 16, 5
    preds1 = jax.random.uniform(k1, (N1, C1), dtype=jnp.float32)           # probabilities
    targets1 = (jax.random.uniform(k2, (N1, C1)) > 0.5).astype(jnp.float32)
    weights1 = 1.0 + jnp.arange(C1, dtype=jnp.float32) / C1

    loss1 = weighted_log_loss(preds1, targets1, weights1)
    jax.block_until_ready(loss1)
    ref1 = weighted_log_loss_ref(preds1, targets1, weights1)
    assert jnp.allclose(loss1, ref1, rtol=1e-5, atol=1e-6), (loss1, ref1)

    # Case 2: ragged N (multi-block grid with a masked partial final block), wide C.
    N2, C2 = 300, 128
    preds2 = jax.random.uniform(k3, (N2, C2), dtype=jnp.float32)
    targets2 = (jax.random.uniform(k4, (N2, C2)) > 0.5).astype(jnp.float32)
    weights2 = 0.5 + jnp.arange(C2, dtype=jnp.float32) / C2

    loss2 = weighted_log_loss(preds2, targets2, weights2)
    jax.block_until_ready(loss2)
    ref2 = weighted_log_loss_ref(preds2, targets2, weights2)
    assert jnp.allclose(loss2, ref2, rtol=1e-5, atol=1e-6), (loss2, ref2)

    print("KERNEL_OK")
</pallas_src>

<mosaic_0001>
module attributes {stable_mosaic.version = 11 : i64} {
  func.func @_wll_kernel(%arg0: i32, %arg1: memref<16x5xf32, #tpu.memory_space<vmem>>, %arg2: memref<16x5xf32, #tpu.memory_space<vmem>>, %arg3: memref<8x5xf32, #tpu.memory_space<vmem>>) attributes {dimension_semantics = [#tpu.dimension_semantics<parallel>], iteration_bounds = array<i64: 1>, scalar_prefetch = 0 : i64, scratch_operands = 0 : i64, tpu.core_type = #tpu.core_type<tc>, window_params = [{transform_indices = @transform_0, window_bounds = array<i64: 16, 5>}, {transform_indices = @transform_1, window_bounds = array<i64: 16, 5>}, {transform_indices = @transform_2, window_bounds = array<i64: 8, 5>}]} {
    %c0 = arith.constant 0 : index
    %c0_0 = arith.constant 0 : index
    %0 = vector.load %arg1[%c0, %c0_0] : memref<16x5xf32, #tpu.memory_space<vmem>>, vector<16x5xf32>
    %c0_1 = arith.constant 0 : index
    %c0_2 = arith.constant 0 : index
    %1 = vector.load %arg2[%c0_1, %c0_2] : memref<16x5xf32, #tpu.memory_space<vmem>>, vector<16x5xf32>
    %cst = arith.constant 1.000000e-15 : f32
    %cst_3 = arith.constant 1.000000e+00 : f32
    %2 = vector.broadcast %cst : f32 to vector<16x5xf32>
    %3 = arith.maximumf %2, %0 : vector<16x5xf32>
    %4 = vector.broadcast %cst_3 : f32 to vector<16x5xf32>
    %5 = arith.minimumf %4, %3 : vector<16x5xf32>
    %6 = math.log %5 : vector<16x5xf32>
    %cst_4 = arith.constant 1.000000e+00 : f32
    %7 = vector.broadcast %cst_4 : f32 to vector<16x5xf32>
    %8 = arith.subf %7, %5 : vector<16x5xf32>
    %9 = math.log %8 : vector<16x5xf32>
    %10 = arith.subf %6, %9 : vector<16x5xf32>
    %11 = arith.mulf %1, %10 : vector<16x5xf32>
    %12 = arith.addf %11, %9 : vector<16x5xf32>
    %cst_5 = arith.constant 0.000000e+00 : f32
    %13 = vector.broadcast %cst_5 : f32 to vector<16x5xf32>
    %14 = arith.subf %13, %12 : vector<16x5xf32>
    %15 = vector.shape_cast %14 : vector<16x5xf32> to vector<2x8x5xf32>
    %cst_6 = arith.constant dense<0.000000e+00> : vector<8x5xf32>
    %16 = vector.multi_reduction <add>, %15, %cst_6 [0] : vector<2x8x5xf32> to vector<8x5xf32>
    %c0_7 = arith.constant 0 : index
    %c0_8 = arith.constant 0 : index
    %17 = vector.load %arg3[%c0_7, %c0_8] : memref<8x5xf32, #tpu.memory_space<vmem>>, vector<8x5xf32>
    tpu.vector_store %arg3[%c0_7, %c0_8], %16 {strides = array<i32>} : memref<8x5xf32, #tpu.memory_space<vmem>>, vector<8x5xf32>,
    return
  }
  func.func @transform_0(%arg0: i32) -> (i32, i32) {
    %c0_i32 = arith.constant 0 : i32
    %c0_i32_0 = arith.constant 0 : i32
    return %arg0, %c0_i32 : i32, i32
  }
  func.func @transform_1(%arg0: i32) -> (i32, i32) {
    %c0_i32 = arith.constant 0 : i32
    %c0_i32_0 = arith.constant 0 : i32
    return %arg0, %c0_i32 : i32, i32
  }
  func.func @transform_2(%arg0: i32) -> (i32, i32) {
    %c0_i32 = arith.constant 0 : i32
    %c0_i32_0 = arith.constant 0 : i32
    return %arg0, %c0_i32 : i32, i32
  }
}

</mosaic_0001>

<llo_original>
// kernel: tpu_custom_call.1
$region0: #{tpu_custom_call.1}
  #allocation0 [shape = 'u32[]', space=smem, size = 0x4, offset = 0x4, fixed_abs, tag = 'smem constant byte address 0x4 - core index']
  #allocation1 [shape = 'u32[144,128]{1,0:T(1,128)}', space=vmem, size = 0x12000, scoped, tag = 'internal scratch']
  %s0 = inlined_call_operand.vmem [shape: f32[16,5], index: 0, kind: input, shape index: {}]
  %s1 = inlined_call_operand.vmem [shape: f32[16,5], index: 1, kind: input, shape index: {}]
  %s2 = inlined_call_operand.hbm [shape: f32[8,5], index: 2, kind: output, shape index: {}]
  %s3 = sld [smem:[#allocation0]]
  $region18: #{tpu_custom_call.1} parent=0
    _
  %s5 = ssub.s32 1, %s3
  %s6 = scalar_select 0, %s5, %s3
  $region1: #{tpu_custom_call.1} parent=0
    #allocation2 [shape = 'u8[4096]{0}', space=vmem, size = 0x1000, scoped, tag = 'output window, operand 0, single buffered']
    #allocation3 [shape = 's32[1]{0}', space=sflag, size = 0x4, scoped, tag = 'scoped memory for tpu_custom_call.1']
    %7 = vsyncpa [#allocation3], 0
    // Predicated region
    $region2: #{tpu_custom_call.1} parent=1 // pred_check
      _
    $region3: #{tpu_custom_call.1} parent=1 // pred_check_branch
      %9 = sbr.rel (0) target = $region5
    $region4: #{tpu_custom_call.1} parent=1 // pred_region
      _
    $region5: #{tpu_custom_call.1} parent=1 // pred_fallthru
      _
    // Predicated region
    $region6: #{tpu_custom_call.1} parent=1 // pred_check
      _
    $region7: #{tpu_custom_call.1} parent=1 // pred_check_branch
      %11 = sbr.rel (0) target = $region9
    $region8: #{tpu_custom_call.1} parent=1 // pred_region
      _
    $region9: #{tpu_custom_call.1} parent=1 // pred_fallthru
      _
    %v12 = vld [vmem:[%s0] sm:$0xff]
    %v13 = vld [vmem:[%s0 + $0x8] sm:$0xff]
    %v14 = vld [vmem:[%s1] sm:$0xff]
    %v15 = vld [vmem:[%s1 + $0x8] sm:$0xff]
    %v16 = vmax.f32 %v12, 1e-15
    %v17 = vmax.f32 %v13, 1e-15
    %v18 = vmin.f32 %v16, 1.0
    %v19 = vmin.f32 %v17, 1.0
    %v20 = vlog2.pop %v18
    %v21 = vmul.f32 %v20, 0.6931472
    %v22 = vlog2.pop %v19
    %v23 = vmul.f32 %v22, 0.6931472
    %v24 = vsub.f32 1.0, %v18
    %v25 = vsub.f32 1.0, %v19
    %v26 = vlog2.pop %v24
    %v27 = vmul.f32 %v26, 0.6931472
    %v28 = vlog2.pop %v25
    %v29 = vmul.f32 %v28, 0.6931472
    %v30 = vsub.f32 %v21, %v27
    %v31 = vsub.f32 %v23, %v29
    %v32 = vmul.f32 %v14, %v30
    %v33 = vmul.f32 %v15, %v31
    %v34 = vadd.f32 %v32, %v27
    %v35 = vadd.f32 %v33, %v29
    %v36 = vsub.f32 0.0, %v34
    %v37 = vsub.f32 0.0, %v35
    %vm38 = vcmask 39936
    %v39 = vsel %vm38, %v36, 0.0
    %v40 = vsel %vm38, %v37, 0.0
    %v41 = vadd.f32 %v39, %v40
    %42 = vst.msk [vmem:[#allocation2] sm:$0xff] %vm38, %v41
    // Predicated region
    $region10: #{tpu_custom_call.1} parent=1 // pred_check
      _
    $region11: #{tpu_custom_call.1} parent=1 // pred_check_branch
      %44 = sbr.rel (0) target = $region13
    $region12: #{tpu_custom_call.1} parent=1 // pred_region
      %s46 = ssub.s32 128, 128
      %47 = vsyncadd [#allocation3], %s46
      %s49 = sshll.u32 [#allocation2], 4
      %s50 = int_to_ptr.vmem [resolvable:$true] %s49
      %52 = dma.vmem_to_hbm [thread:$0]  %s50, 128, %s2, [#allocation3]
    $region13: #{tpu_custom_call.1} parent=1 // pred_fallthru
      _
    // Predicated region
    $region14: #{tpu_custom_call.1} parent=1 // pred_check
      _
    $region15: #{tpu_custom_call.1} parent=1 // pred_check_branch
      %54 = sbr.rel (0) target = $region17
    $region16: #{tpu_custom_call.1} parent=1 // pred_region
      %55 = dma.done [#allocation3], 128
    $region17: #{tpu_custom_call.1} parent=1 // pred_fallthru
      _
    %56 = vsyncpa [#allocation3], 1

</llo_original>
